<compile_context>
chip_gen: v6e
topology: v6e:2x2x1
jax: 0.10.0
libtpu: 0.0.40
codegen_flags: <defaults>
</compile_context>

<pallas_src>
import numpy as np
import jax
import jax.numpy as jnp
from jax import lax
from jax.experimental import pallas as pl
from jax.experimental.pallas import tpu as pltpu

H_DIM = 1024          # hardcoded in StrGNNLayer.__init__
HOP_LAYERS = 2        # args.hop_layer
FUSE_TN = 256         # output-feature tile: 256-multiple for v6e/v7x MXU, 128-aligned for v5e
SUBLANE = 8


# ----------------------------- Pallas kernels -----------------------------

def _pool_kernel(pool_ref, x_ref, out_ref):
    # pool_ref: (1, Spad, tT) bf16   x_ref: (tT, C) f32   out_ref: (1, Spad, C) f32
    part = jnp.dot(pool_ref[0], x_ref[...].astype(jnp.bfloat16),
                   preferred_element_type=jnp.float32)

    @pl.when(pl.program_id(1) == 0)
    def _init():
        out_ref[0] = part

    @pl.when(pl.program_id(1) > 0)
    def _acc():
        out_ref[0] = out_ref[0] + part


def sentence_pool(pool_bf16, x2, B, Spad, C, t_tile):
    """sent_vecs[b] = pool[b] @ x[:, b, :] with the T axis as a reduction grid."""
    T = x2.shape[0]
    return pl.pallas_call(
        _pool_kernel,
        out_shape=jax.ShapeDtypeStruct((B, Spad, C), jnp.float32),
        grid=(B, T // t_tile),
        in_specs=[
            pl.BlockSpec((1, Spad, t_tile), lambda b, t: (b, 0, t)),
            # x2 is x.reshape(T, B*C): block (t_tile, C) at column-block b is
            # exactly x[t0:t0+t_tile, b, :] -- the DMA gathers the strided slab.
            pl.BlockSpec((t_tile, C), lambda b, t: (t, b)),
        ],
        out_specs=pl.BlockSpec((1, Spad, C), lambda b, t: (b, 0, 0)),
        compiler_params=pltpu.CompilerParams(
            dimension_semantics=("parallel", "arbitrary")),
    )(pool_bf16, x2)


def _fuse_kernel(sent_ref, w_ref, b_ref, res_ref, mask_ref, out_ref):
    # sent_ref: (M, K) f32   w_ref: (tn, K) bf16   b_ref: (1, tn) f32
    # res_ref:  (M, tn) f32  mask_ref: (M, tn) f32 out_ref: (M, tn) f16
    lhs = sent_ref[...].astype(jnp.bfloat16)
    # contract dim 1 of both operands: MXU consumes the (N, K) weight directly,
    # no wrapper transpose needed.
    y = lax.dot_general(lhs, w_ref[...],
                        dimension_numbers=(((1,), (1,)), ((), ())),
                        preferred_element_type=jnp.float32)
    y = jnp.maximum(y + b_ref[...], 0.0) + res_ref[...]   # relu_(linear) + residual
    out_ref[...] = (y * mask_ref[...]).astype(jnp.float16)


def fuse_layer(sent2d, w_eff_bf16, bias2d, mask_tile, tn=FUSE_TN):
    M, K = sent2d.shape
    N = w_eff_bf16.shape[0]
    assert N % tn == 0 and w_eff_bf16.shape[1] == K
    return pl.pallas_call(
        _fuse_kernel,
        out_shape=jax.ShapeDtypeStruct((M, N), jnp.float16),
        grid=(N // tn,),
        in_specs=[
            pl.BlockSpec((M, K), lambda n: (0, 0)),    # LHS, resident across N tiles
            pl.BlockSpec((tn, K), lambda n: (n, 0)),   # W_eff (N, K) row-slab
            pl.BlockSpec((1, tn), lambda n: (0, n)),   # bias
            pl.BlockSpec((M, tn), lambda n: (0, n)),   # residual = sent_vecs N-slice
            pl.BlockSpec((M, tn), lambda n: (0, 0)),   # lane-dense row-valid mask
        ],
        out_specs=pl.BlockSpec((M, tn), lambda n: (0, n)),
        compiler_params=pltpu.CompilerParams(
            dimension_semantics=("parallel",)),
    )(sent2d, w_eff_bf16, bias2d, sent2d, mask_tile)


# ------------------------------- host glue ----------------------------------

def build_pool_matrix(segments_np, sublane=SUBLANE):
    """Host-side segment-mean pooling matrix (B, Spad, T) + row-valid mask.

    Reproduces obtain_sent_vecs slicing: sentence s spans [start_s, start_{s+1})
    and the last sentence spans [start_last, T-1) (PyTorch x[front:-1] drops the
    final token).  An empty last sentence (segment start at T-1) yields a zero
    row here instead of the reference's NaN mean.
    """
    B, T = segments_np.shape
    nz = segments_np != 0
    sent_lens = nz.sum(axis=1).astype(np.int64)
    assert (sent_lens > 0).all(), "each batch element needs >= 1 segment"
    S = int(sent_lens.max())
    Spad = ((S + sublane - 1) // sublane) * sublane
    cum = np.cumsum(nz.astype(np.int32), axis=1)           # (B, T)
    seg_id = cum - 1                                        # token -> sentence id
    t_idx = np.arange(T)
    valid_tok = (cum >= 1) & (t_idx[None, :] != T - 1)      # last token excluded
    member = ((seg_id[:, None, :] == np.arange(Spad)[None, :, None])
              & valid_tok[:, None, :]).astype(np.float32)   # (B, Spad, T)
    count = member.sum(-1, keepdims=True)
    pool = np.where(count > 0, member / np.maximum(count, 1.0), 0.0).astype(np.float32)
    # exact validity from sent_lens (avoids the reference's "channel0 == 0" quirk
    # that can mask a genuinely valid sentence whose pooled first channel is 0.0)
    row_valid = (np.arange(Spad)[None, :] < sent_lens[:, None]).astype(np.float32)
    return pool, row_valid, sent_lens.tolist(), S, Spad


def _pick_t_tile(T, max_tile=512):
    if T <= max_tile:
        return T
    for d in (512, 384, 256, 128, 64, 32, 16, 8):
        if T % d == 0:
            return d
    return T


def str_gnn_forward(params, x, encoder_padding_mask, segments_np):
    # encoder_padding_mask is only used by the reference in the degenerate
    # fallback (a batch with zero segments), which is not supported here.
    del encoder_padding_mask
    x = x.astype(jnp.float32)
    T, B, C = x.shape

    pool_np, row_valid_np, sent_lens, S, Spad = build_pool_matrix(segments_np)
    pool = jnp.asarray(pool_np, dtype=jnp.bfloat16)         # (B, Spad, T)

    # keep x in native (T, B, C) layout: (T, B*C) reshape is free/contiguous and
    # the per-batch (t_tile, C) slab is gathered by the BlockSpec DMA.  x is
    # DMA'd as f32 and cast to bf16 in-kernel (4 B/elem of HBM traffic vs 6+2
    # for a separate wrapper cast pass).
    x2 = x.reshape(T, B * C)
    sent_vecs = sentence_pool(pool, x2, B, Spad, C, _pick_t_tile(T))  # (B,Spad,C) f32

    # Identity hop placeholders => cat([s]*hop) @ W.T == s @ (W[:, :C]+W[:, C:]).T
    # Fold once: halves K/FLOPs and removes the (B, S, hop*C) HBM concat.
    # TODO(synk): HierGNNLayer / LsrHierGNNLayer source not provided; when real
    # hops land, replace the fold with a hop-stacked gnn_out and a K-reduction
    # grid axis in fuse_layer.
    w = params["fuse_w"]                                    # (C, hop*C)
    w_eff = (w[:, :C] + w[:, C:]).astype(jnp.bfloat16)      # (N=C, K=C)
    bias2d = params["fuse_b"].astype(jnp.float32)[None, :]  # (1, C)

    M = B * Spad
    sent2d = sent_vecs.reshape(M, C)
    mask_tile = jnp.asarray(
        np.ascontiguousarray(
            np.broadcast_to(row_valid_np.reshape(M, 1), (M, FUSE_TN))),
        dtype=jnp.float32)

    fused = fuse_layer(sent2d, w_eff, bias2d, mask_tile)    # (M, C) f16
    gnn_out = fused.reshape(B, Spad, C)[:, :S, :]
    gnn_out = jnp.transpose(gnn_out, (1, 0, 2))             # (S, B, C) f16 (cheap: fp16, small)

    # placeholders (hop layers are identity; see TODO above)
    gnn_int_m = jnp.zeros((B, HOP_LAYERS, S, S), jnp.float32)
    gnn_r_prob = jnp.zeros((B, HOP_LAYERS, S), jnp.float32)

    valid_mask = jnp.asarray(row_valid_np[:, :S] > 0)       # (B, S) bool, True = valid
    return gnn_out, gnn_int_m, gnn_r_prob, ~valid_mask, sent_lens


# --------------------------------- main -------------------------------------

if __name__ == "__main__":
    B, T, C = 2, 16, H_DIM
    key = jax.random.PRNGKey(0)
    kx, kw, kb = jax.random.split(key, 3)

    x = jax.random.normal(kx, (T, B, C), dtype=jnp.float32)
    encoder_padding_mask = jnp.zeros((B, T), dtype=bool).at[1, T - 2:].set(True)

    segments_np = np.zeros((B, T), dtype=np.float32)
    segments_np[0, [0, 5, 10]] = 1.0
    segments_np[1, [0, 8]] = 1.0

    params = {
        "fuse_w": jax.random.normal(kw, (H_DIM, H_DIM * HOP_LAYERS),
                                    dtype=jnp.float32) * 0.02,
        "fuse_b": jax.random.normal(kb, (H_DIM,), dtype=jnp.float32) * 0.02,
    }

    gnn_out, gnn_int_m, gnn_r_prob, pad_mask, sent_lens = str_gnn_forward(
        params, x, encoder_padding_mask, segments_np)

    jax.block_until_ready(gnn_out)
    jax.block_until_ready(gnn_int_m)
    jax.block_until_ready(gnn_r_prob)
    jax.block_until_ready(pad_mask)

    # --- pure-numpy f32 reference (validates pooling + identity-hop fold) ---
    pool_np, row_valid_np, ref_lens, S, Spad = build_pool_matrix(segments_np)
    x_np = np.asarray(x, np.float32)
    ref_sent = np.einsum("bst,tbc->bsc", pool_np, x_np)             # (B, Spad, C)
    ref_cat = np.concatenate([ref_sent] * HOP_LAYERS, axis=-1)
    w_np = np.asarray(params["fuse_w"], np.float32)
    b_np = np.asarray(params["fuse_b"], np.float32)
    ref = np.maximum(ref_cat @ w_np.T + b_np, 0.0) + ref_sent
    ref = ref * row_valid_np[:, :, None]
    ref = np.transpose(ref[:, :S, :], (1, 0, 2)).astype(np.float16)

    assert gnn_out.shape == (max(sent_lens), B, C) and gnn_out.dtype == jnp.float16
    assert sent_lens == ref_lens
    np.testing.assert_allclose(np.asarray(gnn_out, np.float32),
                               ref.astype(np.float32), rtol=5e-2, atol=5e-2)
    print("KERNEL_OK")
</pallas_src>

<mosaic_0001>
module attributes {stable_mosaic.version = 11 : i64} {
  func.func @_pool_kernel(%arg0: i32, %arg1: i32, %arg2: memref<1x8x16xbf16, #tpu.memory_space<vmem>>, %arg3: memref<16x1024xf32, #tpu.memory_space<vmem>>, %arg4: memref<1x8x1024xf32, #tpu.memory_space<vmem>>) attributes {dimension_semantics = [#tpu.dimension_semantics<parallel>, #tpu.dimension_semantics<arbitrary>], iteration_bounds = array<i64: 2, 1>, scalar_prefetch = 0 : i64, scratch_operands = 0 : i64, tpu.core_type = #tpu.core_type<tc>, window_params = [{transform_indices = @transform_0, window_bounds = array<i64: 1, 8, 16>}, {transform_indices = @transform_1, window_bounds = array<i64: 16, 1024>}, {transform_indices = @transform_2, window_bounds = array<i64: 1, 8, 1024>}]} {
    %c0 = arith.constant 0 : index
    %c0_0 = arith.constant 0 : index
    %c0_1 = arith.constant 0 : index
    %0 = vector.load %arg2[%c0, %c0_0, %c0_1] : memref<1x8x16xbf16, #tpu.memory_space<vmem>>, vector<1x8x16xbf16>
    %1 = vector.shape_cast %0 : vector<1x8x16xbf16> to vector<8x16xbf16>
    %c0_2 = arith.constant 0 : index
    %c0_3 = arith.constant 0 : index
    %2 = vector.load %arg3[%c0_2, %c0_3] : memref<16x1024xf32, #tpu.memory_space<vmem>>, vector<16x1024xf32>
    %3 = arith.truncf %2 : vector<16x1024xf32> to vector<16x1024xbf16>
    %cst = arith.constant dense<0.000000e+00> : vector<8x1024xf32>
    %4 = tpu.matmul %1, %3, %cst {dimension_numbers = #tpu.dot_dimension_numbers<[1], [0], [0], [1], [0, 0, 1, 1], [], []>} : vector<8x16xbf16>, vector<16x1024xbf16>, vector<8x1024xf32> -> vector<8x1024xf32>
    %c0_i32 = arith.constant 0 : i32
    %5 = arith.cmpi eq, %arg1, %c0_i32 : i32
    %6 = arith.extui %5 : i1 to i32
    %c0_i32_4 = arith.constant 0 : i32
    %7 = arith.cmpi ne, %6, %c0_i32_4 : i32
    scf.if %7 {
      %c0_7 = arith.constant 0 : index
      %c0_8 = arith.constant 0 : index
      %c0_9 = arith.constant 0 : index
      %11 = vector.load %arg4[%c0_7, %c0_8, %c0_9] : memref<1x8x1024xf32, #tpu.memory_space<vmem>>, vector<1x8x1024xf32>
      %12 = vector.shape_cast %11 : vector<1x8x1024xf32> to vector<8x1024xf32>
      %13 = vector.shape_cast %4 : vector<8x1024xf32> to vector<1x8x1024xf32>
      tpu.vector_store %arg4[%c0_7, %c0_8, %c0_9], %13 {strides = array<i32>} : memref<1x8x1024xf32, #tpu.memory_space<vmem>>, vector<1x8x1024xf32>,
    } else {
    }
    %c0_i32_5 = arith.constant 0 : i32
    %8 = arith.cmpi sgt, %arg1, %c0_i32_5 : i32
    %9 = arith.extui %8 : i1 to i32
    %c0_i32_6 = arith.constant 0 : i32
    %10 = arith.cmpi ne, %9, %c0_i32_6 : i32
    scf.if %10 {
      %c0_7 = arith.constant 0 : index
      %c0_8 = arith.constant 0 : index
      %c0_9 = arith.constant 0 : index
      %11 = vector.load %arg4[%c0_7, %c0_8, %c0_9] : memref<1x8x1024xf32, #tpu.memory_space<vmem>>, vector<1x8x1024xf32>
      %12 = vector.shape_cast %11 : vector<1x8x1024xf32> to vector<8x1024xf32>
      %13 = arith.addf %12, %4 : vector<8x1024xf32>
      %c0_10 = arith.constant 0 : index
      %c0_11 = arith.constant 0 : index
      %c0_12 = arith.constant 0 : index
      %14 = vector.load %arg4[%c0_10, %c0_11, %c0_12] : memref<1x8x1024xf32, #tpu.memory_space<vmem>>, vector<1x8x1024xf32>
      %15 = vector.shape_cast %14 : vector<1x8x1024xf32> to vector<8x1024xf32>
      %16 = vector.shape_cast %13 : vector<8x1024xf32> to vector<1x8x1024xf32>
      tpu.vector_store %arg4[%c0_10, %c0_11, %c0_12], %16 {strides = array<i32>} : memref<1x8x1024xf32, #tpu.memory_space<vmem>>, vector<1x8x1024xf32>,
    } else {
    }
    return
  }
  func.func @transform_0(%arg0: i32, %arg1: i32) -> (i32, i32, i32) {
    %c0_i32 = arith.constant 0 : i32
    %c0_i32_0 = arith.constant 0 : i32
    return %arg0, %c0_i32, %arg1 : i32, i32, i32
  }
  func.func @transform_1(%arg0: i32, %arg1: i32) -> (i32, i32) {
    %c0_i32 = arith.constant 0 : i32
    return %arg1, %arg0 : i32, i32
  }
  func.func @transform_2(%arg0: i32, %arg1: i32) -> (i32, i32, i32) {
    %c0_i32 = arith.constant 0 : i32
    %c0_i32_0 = arith.constant 0 : i32
    %c0_i32_1 = arith.constant 0 : i32
    return %arg0, %c0_i32, %c0_i32_0 : i32, i32, i32
  }
}

</mosaic_0001>

<llo_original>
// kernel: tpu_custom_call.1
$region0: #{tpu_custom_call.1}
  #allocation0 [shape = 'u32[]', space=smem, size = 0x4, offset = 0x4, fixed_abs, tag = 'smem constant byte address 0x4 - core index']
  #allocation1 [shape = 'u32[144,128]{1,0:T(1,128)}', space=vmem, size = 0x12000, scoped, tag = 'internal scratch']
  %s0 = inlined_call_operand.hbm [shape: bf16[2,8,16], index: 0, kind: input, shape index: {}]
  %s1 = inlined_call_operand.hbm [shape: f32[16,2048], index: 1, kind: input, shape index: {}]
  %s2 = inlined_call_operand.hbm [shape: f32[2,8,1024], index: 2, kind: output, shape index: {}]
  %s3 = sld [smem:[#allocation0]]
  $region57: #{tpu_custom_call.1} parent=0
    _
  %s5 = ssub.s32 1, %s3
  %s6 = scalar_select 0, %s5, %s3
  $region1: #{tpu_custom_call.1} parent=0
    #allocation2 [shape = 'u8[4096]{0}', space=vmem, size = 0x1000, scoped, tag = 'input window, operand 0']
    #allocation3 [shape = 's32[2]{0}', space=sflag, size = 0x8, scoped, tag = 'scoped memory for tpu_custom_call.1']
    #allocation4 [shape = 's32[2]{0}', space=sflag, size = 0x8, scoped, tag = 'scoped memory for tpu_custom_call.1']
    #allocation5 [shape = 'u8[131072]{0}', space=vmem, size = 0x20000, scoped, tag = 'input window, operand 1']
    #allocation6 [shape = 's32[2]{0}', space=sflag, size = 0x8, scoped, tag = 'scoped memory for tpu_custom_call.1']
    #allocation7 [shape = 'u8[65536]{0}', space=vmem, size = 0x10000, scoped, tag = 'output window, operand 0']
    %7 = vsyncpa [#allocation3], 0
    %s8 = scalar_lea.sflag [#allocation3], 1
    %9 = vsyncpa %s8, 0
    %10 = vsyncpa [#allocation6], 0
    %s11 = scalar_lea.sflag [#allocation6], 1
    %12 = vsyncpa %s11, 0
    %13 = vsyncpa [#allocation4], 0
    %s14 = scalar_lea.sflag [#allocation4], 1
    %15 = vsyncpa %s14, 0
    loop: start=0, step=1, limit=4
    $region2: #{tpu_custom_call.1} parent=1 // loop_pre_header
      _
    $region3: #{tpu_custom_call.1} parent=1 // loop_header
      %s17 = sphi 0, %s21
      %p18 = scmp.ge.s32.totalorder %s17, 4
      %s24 = sphi 0, %s36
      %s25 = sphi 0, %s32
      %s26 = sphi 0, %s24
      %s27 = sphi 0, %s25
      %s28 = sphi 0, %s26
      %s29 = sphi 0, %s27
      %s41 = sphi 0, %s43
      %s44 = sphi 0, %s41
      %s45 = sphi 0, %s44
      %s61 = sphi 0, %s45
      %s69 = sphi 0, %s71
      %s72 = sphi 0, %s69
      %s73 = sphi 0, %s72
      %s89 = sphi 0, %s73
      %s95 = sphi 0, %s97
      %s98 = sphi 0, %s95
      %s99 = sphi 0, %s98
      %s115 = sphi 0, %s99
    $region4: #{tpu_custom_call.1} parent=1 // loop_header_branch
      %20 = sbr.rel (%p18) target = $region8
    $region5: #{tpu_custom_call.1} parent=1 // loop_body
      %s22 = ssub.s32 %s17, 1
      %s23 = ssub.s32 %s17, 2
      %s30 = sadd.s32 1, %s25
      %p31 = scmp.ge.s32.totalorder %s30, 1
      %s32 = scalar_select %p31, 0, %s30
      %s33 = sadd.s32 1, %s24
      %s34 = scalar_select %p31, %s33, %s24
      %p35 = scmp.ge.s32.totalorder %s34, 2
      %s36 = scalar_select %p35, 0, %s34
      %s37 = ssub.s32 %s24, %s36
      %s38 = ssub.s32 %s25, %s32
      %s39 = sor.u32 %s37, %s38
      %p40 = scmp.eq.s32.totalorder %s39, 0
      %s42 = sadd.s32 %s41, 1
      %s43 = scalar_select %p40, %s41, %s42
      %p46 = pneg %p40
      %p47 = scmp.eq.s32.totalorder %s17, 1
      %p48 = por %p46, %p47
      %p49 = scmp.ne.s32.totalorder %s41, %s44
      %p50 = scmp.eq.s32.totalorder %s17, 0
      %p51 = por %p49, %p50
      %p52 = scmp.ne.s32.totalorder %s41, %s44
      %p53 = scmp.eq.s32.totalorder %s22, 1
      %p54 = por %p52, %p53
      %p55 = scmp.ne.s32.totalorder %s44, %s45
      %p56 = scmp.eq.s32.totalorder %s22, 0
      %p57 = por %p55, %p56
      %p58 = scmp.ne.s32.totalorder %s44, %s45
      %p59 = scmp.eq.s32.totalorder %s23, 1
      %p60 = por %p58, %p59
      %p62 = scmp.ne.s32.totalorder %s45, %s61
      %p63 = scmp.eq.s32.totalorder %s23, 0
      %p64 = por %p62, %p63
      %s65 = ssub.s32 %s25, %s32
      %s66 = ssub.s32 %s24, %s36
      %s67 = sor.u32 %s65, %s66
      %p68 = scmp.eq.s32.totalorder %s67, 0
      %s70 = sadd.s32 %s69, 1
      %s71 = scalar_select %p68, %s69, %s70
      %p74 = pneg %p68
      %p75 = scmp.eq.s32.totalorder %s17, 1
      %p76 = por %p74, %p75
      %p77 = scmp.ne.s32.totalorder %s69, %s72
      %p78 = scmp.eq.s32.totalorder %s17, 0
      %p79 = por %p77, %p78
      %p80 = scmp.ne.s32.totalorder %s69, %s72
      %p81 = scmp.eq.s32.totalorder %s22, 1
      %p82 = por %p80, %p81
      %p83 = scmp.ne.s32.totalorder %s72, %s73
      %p84 = scmp.eq.s32.totalorder %s22, 0
      %p85 = por %p83, %p84
      %p86 = scmp.ne.s32.totalorder %s72, %s73
      %p87 = scmp.eq.s32.totalorder %s23, 1
      %p88 = por %p86, %p87
      %p90 = scmp.ne.s32.totalorder %s73, %s89
      %p91 = scmp.eq.s32.totalorder %s23, 0
      %p92 = por %p90, %p91
      %s93 = ssub.s32 %s24, %s36
      %p94 = scmp.eq.s32.totalorder %s93, 0
      %s96 = sadd.s32 %s95, 1
      %s97 = scalar_select %p94, %s95, %s96
      %p100 = pneg %p94
      %p101 = scmp.eq.s32.totalorder %s17, 1
      %p102 = por %p100, %p101
      %p103 = scmp.ne.s32.totalorder %s95, %s98
      %p104 = scmp.eq.s32.totalorder %s17, 0
      %p105 = por %p103, %p104
      %p106 = scmp.ne.s32.totalorder %s95, %s98
      %p107 = scmp.eq.s32.totalorder %s22, 1
      %p108 = por %p106, %p107
      %p109 = scmp.ne.s32.totalorder %s98, %s99
      %p110 = scmp.eq.s32.totalorder %s22, 0
      %p111 = por %p109, %p110
      %p112 = scmp.ne.s32.totalorder %s98, %s99
      %p113 = scmp.eq.s32.totalorder %s23, 1
      %p114 = por %p112, %p113
      %p116 = scmp.ne.s32.totalorder %s99, %s115
      %p117 = scmp.eq.s32.totalorder %s23, 0
      %p118 = por %p116, %p117
      %p119 = scmp.le.s32.totalorder 1, %s17
      %p120 = scmp.lt.s32.totalorder %s17, 3
      %p121 = pnand %p119, %p120
      %p122 = pneg %p121
      // Predicated region
      $region9: #{tpu_custom_call.1} parent=5 // pred_check
        _
      $region10: #{tpu_custom_call.1} parent=5 // pred_check_branch
        %124 = sbr.rel (%p121) target = $region12
      $region11: #{tpu_custom_call.1} parent=5 // pred_region
        %s125 = ssub.s32 %s17, 1
      $region12: #{tpu_custom_call.1} parent=5 // pred_fallthru
        _
      %p126 = scmp.lt.s32.totalorder %s17, 2
      // Predicated region
      $region13: #{tpu_custom_call.1} parent=5 // pred_check
        %p127 = pneg %p126
      $region14: #{tpu_custom_call.1} parent=5 // pred_check_branch
        %129 = sbr.rel (%p127) target = $region16
      $region15: #{tpu_custom_call.1} parent=5 // pred_region
        // Predicated region
        $region17: #{tpu_custom_call.1} parent=15 // pred_check
          %p130 = pneg %p51
        $region18: #{tpu_custom_call.1} parent=15 // pred_check_branch
          %132 = sbr.rel (%p130) target = $region20
        $region19: #{tpu_custom_call.1} parent=15 // pred_region
          %s133 = sand.u32 %s41, 1
          %s134 = scalar_lea.sflag [#allocation3], %s133
          %s135 = sand.u32 %s41, 1
          %s136 = smul.addr %s135, 4
          %s137 = scalar_lea.vmem [#allocation2], %s136
          %s139 = ssub.s32 64, 64
          %140 = vsyncadd %s134, %s139
          %s141 = sadd.s32 %s25, %s24
          %s142 = smul.addr %s141, 64
          %s143 = scalar_lea.hbm %s0, %s142
          %s145 = sshll.u32 %s137, 4
          %s146 = int_to_ptr.vmem [resolvable:$true] %s145
          %148 = dma.hbm_to_vmem [thread:$0]  %s143, 64, %s146, %s134
        $region20: #{tpu_custom_call.1} parent=15 // pred_fallthru
          _
        // Predicated region
        $region21: #{tpu_custom_call.1} parent=15 // pred_check
          %p149 = pneg %p79
        $region22: #{tpu_custom_call.1} parent=15 // pred_check_branch
          %151 = sbr.rel (%p149) target = $region24
        $region23: #{tpu_custom_call.1} parent=15 // pred_region
          %s152 = sand.u32 %s69, 1
          %s153 = scalar_lea.sflag [#allocation6], %s152
          %s154 = sand.u32 %s69, 1
          %s155 = smul.addr %s154, 128
          %s156 = scalar_lea.vmem [#allocation5], %s155
          %s157 = smul.u32 2, %s25
          %s158 = smul.u32 8, %s24
          %s160 = ssub.s32 2048, 2048
          %161 = vsyncadd %s153, %s160
          %s162 = smul.addr %s157, 16
          %s163 = sadd.s32 %s158, %s162
          %s164 = smul.addr %s163, 128
          %s165 = scalar_lea.hbm %s1, %s164
          %s166 = sshll.u32 %s156, 4
          %s167 = int_to_ptr.vmem [resolvable:$true] %s166
          %172 = dma.hbm_to_vmem [thread:$0]  %s165, 2048, %s167, %s153, 2048, 1024, 64
        $region24: #{tpu_custom_call.1} parent=15 // pred_fallthru
          _
      $region16: #{tpu_custom_call.1} parent=5 // pred_fallthru
        _
      %p173 = scmp.le.s32.totalorder 1, %s17
      %p174 = scmp.lt.s32.totalorder %s17, 3
      %p175 = pnand %p173, %p174
      %p176 = pneg %p175
      // Predicated region
      $region25: #{tpu_custom_call.1} parent=5 // pred_check
        _
      $region26: #{tpu_custom_call.1} parent=5 // pred_check_branch
        %178 = sbr.rel (%p175) target = $region28
      $region27: #{tpu_custom_call.1} parent=5 // pred_region
        %s179 = ssub.s32 %s17, 1
        %s180 = sand.u32 %s44, 1
        %s181 = scalar_lea.sflag [#allocation3], %s180
        %s182 = sand.u32 %s44, 1
        %s183 = smul.addr %s182, 4
        %s184 = scalar_lea.vmem [#allocation2], %s183
        // Predicated region
        $region29: #{tpu_custom_call.1} parent=27 // pred_check
          %p185 = pneg %p57
        $region30: #{tpu_custom_call.1} parent=27 // pred_check_branch
          %187 = sbr.rel (%p185) target = $region32
        $region31: #{tpu_custom_call.1} parent=27 // pred_region
          %188 = dma.done %s181, 64
        $region32: #{tpu_custom_call.1} parent=27 // pred_fallthru
          _
        %s189 = sand.u32 %s72, 1
        %s190 = scalar_lea.sflag [#allocation6], %s189
        %s191 = sand.u32 %s72, 1
        %s192 = smul.addr %s191, 128
        %s193 = scalar_lea.vmem [#allocation5], %s192
        // Predicated region
        $region33: #{tpu_custom_call.1} parent=27 // pred_check
          %p194 = pneg %p85
        $region34: #{tpu_custom_call.1} parent=27 // pred_check_branch
          %196 = sbr.rel (%p194) target = $region36
        $region35: #{tpu_custom_call.1} parent=27 // pred_region
          %197 = dma.done %s190, 2048
        $region36: #{tpu_custom_call.1} parent=27 // pred_fallthru
          _
        %s198 = sand.u32 %s44, 1
        %s199 = scalar_lea.sflag [#allocation3], %s198
        %s200 = sand.u32 %s44, 1
        %s201 = smul.addr %s200, 4
        %s202 = scalar_lea.vmem [#allocation2], %s201
        %p203 = pneg %p57
        %p204 = pneg %p54
        %s205 = sand.u32 %s72, 1
        %s206 = scalar_lea.sflag [#allocation6], %s205
        %s207 = sand.u32 %s72, 1
        %s208 = smul.addr %s207, 128
        %s209 = scalar_lea.vmem [#allocation5], %s208
        %p210 = pneg %p85
        %p211 = pneg %p82
        %p212 = pneg %p111
        %p213 = pneg %p108
        %s214 = sand.u32 %s98, 1
        %s215 = scalar_lea.sflag [#allocation4], %s214
        %s216 = sand.u32 %s98, 1
        %s217 = smul.addr %s216, 64
        %s218 = scalar_lea.vmem [#allocation7], %s217
        %s219 = smul.u32 2, %s27
        %s220 = smul.u32 8, %s26
        %v222 = vld [vmem:[%s184] sm:$0xf]
        %v223 = vld [vmem:[%s193] sm:$0xff]
        %v224 = vld [vmem:[%s193 + $0x8] sm:$0xff]
        %v225 = vld [vmem:[%s193 + $0x10] sm:$0xff]
        %v226 = vld [vmem:[%s193 + $0x18] sm:$0xff]
        %v227 = vld [vmem:[%s193 + $0x20] sm:$0xff]
        %v228 = vld [vmem:[%s193 + $0x28] sm:$0xff]
        %v229 = vld [vmem:[%s193 + $0x30] sm:$0xff]
        %v230 = vld [vmem:[%s193 + $0x38] sm:$0xff]
        %v231 = vld [vmem:[%s193 + $0x40] sm:$0xff]
        %v232 = vld [vmem:[%s193 + $0x48] sm:$0xff]
        %v233 = vld [vmem:[%s193 + $0x50] sm:$0xff]
        %v234 = vld [vmem:[%s193 + $0x58] sm:$0xff]
        %v235 = vld [vmem:[%s193 + $0x60] sm:$0xff]
        %v236 = vld [vmem:[%s193 + $0x68] sm:$0xff]
        %v237 = vld [vmem:[%s193 + $0x70] sm:$0xff]
        %v238 = vld [vmem:[%s193 + $0x78] sm:$0xff]
        %v239 = vpack.c.bf16 %v231, %v223
        %v240 = vpack.c.bf16 %v232, %v224
        %v241 = vpack.c.bf16 %v233, %v225
        %v242 = vpack.c.bf16 %v234, %v226
        %v243 = vpack.c.bf16 %v235, %v227
        %v244 = vpack.c.bf16 %v236, %v228
        %v245 = vpack.c.bf16 %v237, %v229
        %v246 = vpack.c.bf16 %v238, %v230
        %vm247 = vcmask 130048
        %v249 = vsel %vm247, %v222, 0
        %251 = vmatprep.subr.bf16.mxu0 0
        %252 = vmatpush1.bf16.msra.mxu0 0
        %253 = vmatprep.subr.bf16.mxu0 0
        %254 = vmatpush1.bf16.msra.mxu0 0
        %255 = vmatprep.subr.bf16.mxu0 0
        %256 = vmatpush1.bf16.msra.mxu0 0
        %257 = vmatprep.subr.bf16.mxu0 0
        %258 = vmatpush1.bf16.msra.mxu0 0
        %259 = vmatprep.subr.bf16.mxu0 0
        %260 = vmatpush1.bf16.msra.mxu0 0
        %261 = vmatprep.subr.bf16.mxu0 0
        %262 = vmatpush1.bf16.msra.mxu0 0
        %263 = vmatprep.subr.bf16.mxu0 0
        %264 = vmatpush1.bf16.msra.mxu0 0
        %265 = vmatprep.subr.bf16.mxu0 %v240
        %266 = vmatpush1.bf16.msra.mxu0 %v239
        %267 = vmatprep.subr.bf16.mxu0 0
        %268 = vmatpush2.bf16.msra.mxu0 0
        %269 = vmatprep.subr.bf16.mxu0 0
        %270 = vmatpush2.bf16.msra.mxu0 0
        %271 = vmatprep.subr.bf16.mxu0 0
        %272 = vmatpush2.bf16.msra.mxu0 0
        %273 = vmatprep.subr.bf16.mxu0 0
        %274 = vmatpush2.bf16.msra.mxu0 0
        %275 = vmatprep.subr.bf16.mxu0 0
        %276 = vmatpush2.bf16.msra.mxu0 0
        %277 = vmatprep.subr.bf16.mxu0 0
        %278 = vmatpush2.bf16.msra.mxu0 0
        %279 = vmatprep.subr.bf16.mxu0 0
        %280 = vmatpush2.bf16.msra.mxu0 0
        %281 = vmatprep.subr.bf16.mxu0 0
        %282 = vmatpush2.bf16.msra.mxu0 0
        %283 = vmatprep.mubr.bf16.mxu0 0
        %284 = vmatmul.mubr.bf16.gmra.mxu0 %v249
        %v285 = vpop.f32.mrf.mxu0
        %v286 = vadd.f32 0.0, %v285
        %v287 = vpop.f32.mrf.mxu0
        %v288 = vadd.f32 0.0, %v287
        %v289 = vpop.f32.mrf.mxu0
        %v290 = vpop.f32.mrf.mxu0
        %291 = vdwg.mxu0
        %292 = vmatprep.subr.bf16.mxu0 0
        %293 = vmatpush1.bf16.msra.mxu0 0
        %294 = vmatprep.subr.bf16.mxu0 0
        %295 = vmatpush1.bf16.msra.mxu0 0
        %296 = vmatprep.subr.bf16.mxu0 0
        %297 = vmatpush1.bf16.msra.mxu0 0
        %298 = vmatprep.subr.bf16.mxu0 0
        %299 = vmatpush1.bf16.msra.mxu0 0
        %300 = vmatprep.subr.bf16.mxu0 0
        %301 = vmatpush1.bf16.msra.mxu0 0
        %302 = vmatprep.subr.bf16.mxu0 0
        %303 = vmatpush1.bf16.msra.mxu0 0
        %304 = vmatprep.subr.bf16.mxu0 0
        %305 = vmatpush1.bf16.msra.mxu0 0
        %306 = vmatprep.subr.bf16.mxu0 %v242
        %307 = vmatpush1.bf16.msra.mxu0 %v241
        %308 = vmatprep.subr.bf16.mxu0 0
        %309 = vmatpush2.bf16.msra.mxu0 0
        %310 = vmatprep.subr.bf16.mxu0 0
        %311 = vmatpush2.bf16.msra.mxu0 0
        %312 = vmatprep.subr.bf16.mxu0 0
        %313 = vmatpush2.bf16.msra.mxu0 0
        %314 = vmatprep.subr.bf16.mxu0 0
        %315 = vmatpush2.bf16.msra.mxu0 0
        %316 = vmatprep.subr.bf16.mxu0 0
        %317 = vmatpush2.bf16.msra.mxu0 0
        %318 = vmatprep.subr.bf16.mxu0 0
        %319 = vmatpush2.bf16.msra.mxu0 0
        %320 = vmatprep.subr.bf16.mxu0 0
        %321 = vmatpush2.bf16.msra.mxu0 0
        %322 = vmatprep.subr.bf16.mxu0 0
        %323 = vmatpush2.bf16.msra.mxu0 0
        %324 = vmatprep.mubr.bf16.mxu0 0
        %325 = vmatmul.mubr.bf16.gmra.mxu0 %v249
        %v326 = vpop.f32.mrf.mxu0
        %v327 = vadd.f32 0.0, %v326
        %v328 = vpop.f32.mrf.mxu0
        %v329 = vadd.f32 0.0, %v328
        %v330 = vpop.f32.mrf.mxu0
        %v331 = vpop.f32.mrf.mxu0
        %332 = vdwg.mxu0
        %333 = vmatprep.subr.bf16.mxu0 0
        %334 = vmatpush1.bf16.msra.mxu0 0
        %335 = vmatprep.subr.bf16.mxu0 0
        %336 = vmatpush1.bf16.msra.mxu0 0
        %337 = vmatprep.subr.bf16.mxu0 0
        %338 = vmatpush1.bf16.msra.mxu0 0
        %339 = vmatprep.subr.bf16.mxu0 0
        %340 = vmatpush1.bf16.msra.mxu0 0
        %341 = vmatprep.subr.bf16.mxu0 0
        %342 = vmatpush1.bf16.msra.mxu0 0
        %343 = vmatprep.subr.bf16.mxu0 0
        %344 = vmatpush1.bf16.msra.mxu0 0
        %345 = vmatprep.subr.bf16.mxu0 0
        %346 = vmatpush1.bf16.msra.mxu0 0
        %347 = vmatprep.subr.bf16.mxu0 %v244
        %348 = vmatpush1.bf16.msra.mxu0 %v243
        %349 = vmatprep.subr.bf16.mxu0 0
        %350 = vmatpush2.bf16.msra.mxu0 0
        %351 = vmatprep.subr.bf16.mxu0 0
        %352 = vmatpush2.bf16.msra.mxu0 0
        %353 = vmatprep.subr.bf16.mxu0 0
        %354 = vmatpush2.bf16.msra.mxu0 0
        %355 = vmatprep.subr.bf16.mxu0 0
        %356 = vmatpush2.bf16.msra.mxu0 0
        %357 = vmatprep.subr.bf16.mxu0 0
        %358 = vmatpush2.bf16.msra.mxu0 0
        %359 = vmatprep.subr.bf16.mxu0 0
        %360 = vmatpush2.bf16.msra.mxu0 0
        %361 = vmatprep.subr.bf16.mxu0 0
        %362 = vmatpush2.bf16.msra.mxu0 0
        %363 = vmatprep.subr.bf16.mxu0 0
        %364 = vmatpush2.bf16.msra.mxu0 0
        %365 = vmatprep.mubr.bf16.mxu0 0
        %366 = vmatmul.mubr.bf16.gmra.mxu0 %v249
        %v367 = vpop.f32.mrf.mxu0
        %v368 = vadd.f32 0.0, %v367
        %v369 = vpop.f32.mrf.mxu0
        %v370 = vadd.f32 0.0, %v369
        %v371 = vpop.f32.mrf.mxu0
        %v372 = vpop.f32.mrf.mxu0
        %373 = vdwg.mxu0
        %374 = vmatprep.subr.bf16.mxu0 0
        %375 = vmatpush1.bf16.msra.mxu0 0
        %376 = vmatprep.subr.bf16.mxu0 0
        %377 = vmatpush1.bf16.msra.mxu0 0
        %378 = vmatprep.subr.bf16.mxu0 0
        %379 = vmatpush1.bf16.msra.mxu0 0
        %380 = vmatprep.subr.bf16.mxu0 0
        %381 = vmatpush1.bf16.msra.mxu0 0
        %382 = vmatprep.subr.bf16.mxu0 0
        %383 = vmatpush1.bf16.msra.mxu0 0
        %384 = vmatprep.subr.bf16.mxu0 0
        %385 = vmatpush1.bf16.msra.mxu0 0
        %386 = vmatprep.subr.bf16.mxu0 0
        %387 = vmatpush1.bf16.msra.mxu0 0
        %388 = vmatprep.subr.bf16.mxu0 %v246
        %389 = vmatpush1.bf16.msra.mxu0 %v245
        %390 = vmatprep.subr.bf16.mxu0 0
        %391 = vmatpush2.bf16.msra.mxu0 0
        %392 = vmatprep.subr.bf16.mxu0 0
        %393 = vmatpush2.bf16.msra.mxu0 0
        %394 = vmatprep.subr.bf16.mxu0 0
        %395 = vmatpush2.bf16.msra.mxu0 0
        %396 = vmatprep.subr.bf16.mxu0 0
        %397 = vmatpush2.bf16.msra.mxu0 0
        %398 = vmatprep.subr.bf16.mxu0 0
        %399 = vmatpush2.bf16.msra.mxu0 0
        %400 = vmatprep.subr.bf16.mxu0 0
        %401 = vmatpush2.bf16.msra.mxu0 0
        %402 = vmatprep.subr.bf16.mxu0 0
        %403 = vmatpush2.bf16.msra.mxu0 0
        %404 = vmatprep.subr.bf16.mxu0 0
        %405 = vmatpush2.bf16.msra.mxu0 0
        %406 = vmatprep.mubr.bf16.mxu0 0
        %407 = vmatmul.mubr.bf16.gmra.mxu0 %v249
        %v408 = vpop.f32.mrf.mxu0
        %v409 = vadd.f32 0.0, %v408
        %v410 = vpop.f32.mrf.mxu0
        %v411 = vadd.f32 0.0, %v410
        %v412 = vpop.f32.mrf.mxu0
        %v413 = vpop.f32.mrf.mxu0
        %414 = vdwg.mxu0
        %p415 = scmp.eq.s32.totalorder %s27, 0
        // Predicated region
        $region37: #{tpu_custom_call.1} parent=27 // pred_check
          %p416 = pneg %p415
        $region38: #{tpu_custom_call.1} parent=27 // pred_check_branch
          %418 = sbr.rel (%p416) target = $region40
        $region39: #{tpu_custom_call.1} parent=27 // pred_region
          %419 = vst [vmem:[%s218] sm:$0xff] %v286
          %420 = vst [vmem:[%s218 + $0x8] sm:$0xff] %v288
          %421 = vst [vmem:[%s218 + $0x10] sm:$0xff] %v327
          %422 = vst [vmem:[%s218 + $0x18] sm:$0xff] %v329
          %423 = vst [vmem:[%s218 + $0x20] sm:$0xff] %v368
          %424 = vst [vmem:[%s218 + $0x28] sm:$0xff] %v370
          %425 = vst [vmem:[%s218 + $0x30] sm:$0xff] %v409
          %426 = vst [vmem:[%s218 + $0x38] sm:$0xff] %v411
        $region40: #{tpu_custom_call.1} parent=27 // pred_fallthru
          _
        %p427 = scmp.gt.s32.totalorder %s27, 0
        // Predicated region
        $region41: #{tpu_custom_call.1} parent=27 // pred_check
          %p428 = pneg %p427
        $region42: #{tpu_custom_call.1} parent=27 // pred_check_branch
          %430 = sbr.rel (%p428) target = $region44
        $region43: #{tpu_custom_call.1} parent=27 // pred_region
          %v431 = vld [vmem:[%s218] sm:$0xff]
          %v432 = vld [vmem:[%s218 + $0x8] sm:$0xff]
          %v433 = vld [vmem:[%s218 + $0x10] sm:$0xff]
          %v434 = vld [vmem:[%s218 + $0x18] sm:$0xff]
          %v435 = vld [vmem:[%s218 + $0x20] sm:$0xff]
          %v436 = vld [vmem:[%s218 + $0x28] sm:$0xff]
          %v437 = vld [vmem:[%s218 + $0x30] sm:$0xff]
          %v438 = vld [vmem:[%s218 + $0x38] sm:$0xff]
          %v439 = vadd.f32 %v431, %v286
          %v440 = vadd.f32 %v432, %v288
          %v441 = vadd.f32 %v433, %v327
          %v442 = vadd.f32 %v434, %v329
          %v443 = vadd.f32 %v435, %v368
          %v444 = vadd.f32 %v436, %v370
          %v445 = vadd.f32 %v437, %v409
          %v446 = vadd.f32 %v438, %v411
          %447 = vst [vmem:[%s218] sm:$0xff] %v439
          %448 = vst [vmem:[%s218 + $0x8] sm:$0xff] %v440
          %449 = vst [vmem:[%s218 + $0x10] sm:$0xff] %v441
          %450 = vst [vmem:[%s218 + $0x18] sm:$0xff] %v442
          %451 = vst [vmem:[%s218 + $0x20] sm:$0xff] %v443
          %452 = vst [vmem:[%s218 + $0x28] sm:$0xff] %v444
          %453 = vst [vmem:[%s218 + $0x30] sm:$0xff] %v445
          %454 = vst [vmem:[%s218 + $0x38] sm:$0xff] %v446
        $region44: #{tpu_custom_call.1} parent=27 // pred_fallthru
          _
        %s455 = sand.u32 %s98, 1
        %s456 = scalar_lea.sflag [#allocation4], %s455
        %s457 = sand.u32 %s98, 1
        %s458 = smul.addr %s457, 64
        %s459 = scalar_lea.vmem [#allocation7], %s458
        // Predicated region
        $region45: #{tpu_custom_call.1} parent=27 // pred_check
          %p460 = pneg %p108
        $region46: #{tpu_custom_call.1} parent=27 // pred_check_branch
          %462 = sbr.rel (%p460) target = $region48
        $region47: #{tpu_custom_call.1} parent=27 // pred_region
          %s464 = ssub.s32 1024, 1024
          %465 = vsyncadd %s456, %s464
          %s466 = smul.addr %s26, 8
          %s467 = smul.addr %s466, 128
          %s468 = scalar_lea.hbm %s2, %s467
          %s470 = sshll.u32 %s459, 4
          %s471 = int_to_ptr.vmem [resolvable:$true] %s470
          %473 = dma.vmem_to_hbm [thread:$0]  %s471, 1024, %s468, %s456
        $region48: #{tpu_custom_call.1} parent=27 // pred_fallthru
          _
      $region28: #{tpu_custom_call.1} parent=5 // pred_fallthru
        _
      %p474 = scmp.le.s32.totalorder 2, %s17
      // Predicated region
      $region49: #{tpu_custom_call.1} parent=5 // pred_check
        %p475 = pneg %p474
      $region50: #{tpu_custom_call.1} parent=5 // pred_check_branch
        %477 = sbr.rel (%p475) target = $region52
      $region51: #{tpu_custom_call.1} parent=5 // pred_region
        %s478 = ssub.s32 %s17, 2
        // Predicated region
        $region53: #{tpu_custom_call.1} parent=51 // pred_check
          %p479 = pneg %p114
        $region54: #{tpu_custom_call.1} parent=51 // pred_check_branch
          %481 = sbr.rel (%p479) target = $region56
        $region55: #{tpu_custom_call.1} parent=51 // pred_region
          %s482 = sand.u32 %s99, 1
          %s483 = scalar_lea.sflag [#allocation4], %s482
          %s484 = sand.u32 %s99, 1
          %s485 = smul.addr %s484, 64
          %s486 = scalar_lea.vmem [#allocation7], %s485
          %487 = dma.done %s483, 1024
        $region56: #{tpu_custom_call.1} parent=51 // pred_fallthru
          _
      $region52: #{tpu_custom_call.1} parent=5 // pred_fallthru
        _
    $region6: #{tpu_custom_call.1} parent=1 // loop_footer
      %s21 = sadd.s32 1, %s17
    $region7: #{tpu_custom_call.1} parent=1 // loop_footer_branch
      %16 = sbr.rel target = $region3
    $region8: #{tpu_custom_call.1} parent=1 // loop_exit
      _
    %488 = vsyncpa [#allocation3], 1
    %s489 = scalar_lea.sflag [#allocation3], 1
    %490 = vsyncpa %s489, 1
    %491 = vsyncpa [#allocation6], 1
    %s492 = scalar_lea.sflag [#allocation6], 1
    %493 = vsyncpa %s492, 1
    %494 = vsyncpa [#allocation4], 1
    %s495 = scalar_lea.sflag [#allocation4], 1
    %496 = vsyncpa %s495, 1

</llo_original>
